<compile_context>
chip_gen: v6e
topology: v6e:2x2x1
jax: 0.10.0
libtpu: 0.0.40
codegen_flags: <defaults>
</compile_context>

<pallas_src>
import functools

import jax
import jax.numpy as jnp
from jax.experimental import pallas as pl
from jax.experimental.pallas import tpu as pltpu


def _box_blur_kernel(x_ref, o_ref, xw_ref, hh_ref, *, kh, kw, H, W, normalized):
    # x_ref / o_ref : (Bc, H, W) unpadded channel-images (input dtype)
    # xw_ref        : (Bc, H, W + 2*pw) f32 scratch (W-reflect-padded tile)
    # hh_ref        : (Bc, H + 2*ph, W) f32 scratch (H-reflect-padded row sums)
    ph, pw = kh // 2, kw // 2

    # Single hoisted cast of the whole tile to f32.
    x = x_ref[...].astype(jnp.float32)

    # ---- horizontal pass: fuse reflect padding along W into VMEM scratch ----
    xw_ref[:, :, pw:pw + W] = x
    for d in range(1, pw + 1):
        # left reflect: padded col (pw - d) <- x col d
        xw_ref[:, :, pw - d:pw - d + 1] = x[:, :, d:d + 1]
        # right reflect: padded col (pw + W - 1 + d) <- x col (W - 1 - d)
        xw_ref[:, :, pw + W - 1 + d:pw + W + d] = x[:, :, W - 1 - d:W - d]

    h = xw_ref[:, :, 0:W]
    for dx in range(1, kw):
        h = h + xw_ref[:, :, dx:dx + W]          # kw adds (separable), not kh*kw

    # ---- vertical pass: fuse reflect padding along H into VMEM scratch ----
    hh_ref[:, ph:ph + H, :] = h
    for d in range(1, ph + 1):
        hh_ref[:, ph - d:ph - d + 1, :] = h[:, d:d + 1, :]
        hh_ref[:, ph + H - 1 + d:ph + H + d, :] = h[:, H - 1 - d:H - d, :]

    acc = hh_ref[:, 0:H, :]
    for dy in range(1, kh):
        acc = acc + hh_ref[:, dy:dy + H, :]

    if normalized:
        acc = acc * (1.0 / float(kh * kw))
    o_ref[...] = acc.astype(o_ref.dtype)


def box_blur(x, kernel_size=(3, 3), border_type="reflect", normalized=True):
    """Box blur of an NCHW image, matching kornia/cirtorch box_blur."""
    if isinstance(kernel_size, int):
        kernel_size = (kernel_size, kernel_size)
    kh, kw = int(kernel_size[0]), int(kernel_size[1])
    N, C, H, W = x.shape
    ph, pw = kh // 2, kw // 2

    # TODO(synk): only 'reflect' border_type and odd kernel sizes are implemented
    # (kornia uses asymmetric padding for even kernels).
    assert border_type == "reflect", "only border_type='reflect' is implemented"
    assert kh % 2 == 1 and kw % 2 == 1, "only odd kernel sizes are implemented"
    assert ph < H and pw < W, "reflect padding requires kernel//2 < spatial size"

    NC = N * C
    # (N, C, H, W) -> (N*C, H, W) is a free leading-dim merge (no HBM copy).
    x3 = x.reshape(NC, H, W)

    # ---- choose how many channel-images to process per grid step (Bc) ----
    # Rough per-channel VMEM footprint: double-buffered in + out tiles (input
    # dtype) plus the two f32 scratch copies (not double-buffered).
    in_bytes = H * W * x.dtype.itemsize
    scratch_bytes = (H * (W + 2 * pw) + (H + 2 * ph) * W) * 4
    per_chan_bytes = 4 * in_bytes + scratch_bytes
    budget_bytes = 24 * 1024 * 1024               # stay comfortably inside VMEM
    target_bc = max(1, budget_bytes // per_chan_bytes)
    if NC >= 2:
        # keep >= 2 grid steps so both TensorCores on 2-TC chips get work
        target_bc = min(target_bc, max(1, NC // 2))
    # largest divisor of NC not exceeding the target (exact blocks, no masking)
    bc = max(d for d in range(1, min(NC, target_bc) + 1) if NC % d == 0)
    grid = (NC // bc,)

    # Raise the scoped VMEM limit if a single block needs it (v5e default is 16MiB).
    # TODO(synk): images whose single-channel footprint exceeds VMEM (e.g. 4K f32
    # on v7x's 64 MiB) need H-tiling with a (kh-1)-row halo; not implemented.
    vmem_need = bc * per_chan_bytes + (1 << 20)
    vmem_limit = min(max(32 * 1024 * 1024, int(vmem_need * 1.2)),
                     128 * 1024 * 1024)

    kernel = functools.partial(
        _box_blur_kernel, kh=kh, kw=kw, H=H, W=W, normalized=normalized
    )

    out = pl.pallas_call(
        kernel,
        out_shape=jax.ShapeDtypeStruct((NC, H, W), x.dtype),
        grid_spec=pltpu.PrefetchScalarGridSpec(
            num_scalar_prefetch=0,
            grid=grid,
            in_specs=[pl.BlockSpec((bc, H, W), lambda i: (i, 0, 0))],
            out_specs=pl.BlockSpec((bc, H, W), lambda i: (i, 0, 0)),
            scratch_shapes=[
                pltpu.VMEM((bc, H, W + 2 * pw), jnp.float32),
                pltpu.VMEM((bc, H + 2 * ph, W), jnp.float32),
            ],
        ),
        compiler_params=pltpu.CompilerParams(
            dimension_semantics=("parallel",),
            vmem_limit_bytes=vmem_limit,
        ),
    )(x3)

    return out.reshape(N, C, H, W)


class BoxBlur:
    """JAX/Pallas equivalent of the PyTorch BoxBlur module."""

    def __init__(self, kernel_size, border_type="reflect", normalized=True):
        self.kernel_size = kernel_size
        self.border_type = border_type
        self.normalized = normalized

    def __call__(self, x):
        return box_blur(x, self.kernel_size, self.border_type, self.normalized)


def _reference_box_blur(x, kernel_size, normalized=True):
    kh, kw = kernel_size
    ph, pw = kh // 2, kw // 2
    xp = jnp.pad(x, ((0, 0), (0, 0), (ph, ph), (pw, pw)), mode="reflect")
    H, W = x.shape[-2:]
    acc = jnp.zeros_like(x, dtype=jnp.float32)
    for dy in range(kh):
        for dx in range(kw):
            acc = acc + xp[:, :, dy:dy + H, dx:dx + W].astype(jnp.float32)
    if normalized:
        acc = acc / (kh * kw)
    return acc.astype(x.dtype)


if __name__ == "__main__":
    key = jax.random.PRNGKey(0)

    # Test 1: module-default shapes (N=2, C=4, 16x16), 3x3 normalized blur.
    x = jax.random.normal(key, (2, 4, 16, 16), dtype=jnp.float32)
    blur = BoxBlur(kernel_size=(3, 3), border_type="reflect", normalized=True)
    y = jax.block_until_ready(blur(x))
    y_ref = _reference_box_blur(x, (3, 3), normalized=True)
    assert y.shape == x.shape and y.dtype == x.dtype
    assert jnp.allclose(y, y_ref, atol=1e-5, rtol=1e-5)

    # Test 2: 5x5 unnormalized blur (exercises pw=ph=2 reflect path, bc=1).
    key2 = jax.random.PRNGKey(0)
    x2 = jax.random.normal(key2, (1, 3, 20, 24), dtype=jnp.float32)
    y2 = jax.block_until_ready(
        box_blur(x2, (5, 5), border_type="reflect", normalized=False)
    )
    y2_ref = _reference_box_blur(x2, (5, 5), normalized=False)
    assert y2.shape == x2.shape and y2.dtype == x2.dtype
    assert jnp.allclose(y2, y2_ref, atol=1e-4, rtol=1e-5)

    print("KERNEL_OK")
</pallas_src>

<mosaic_0001>
module attributes {stable_mosaic.version = 11 : i64} {
  func.func @_box_blur_kernel(%arg0: i32, %arg1: memref<4x16x16xf32, #tpu.memory_space<vmem>>, %arg2: memref<4x16x16xf32, #tpu.memory_space<vmem>>, %arg3: memref<4x16x18xf32, #tpu.memory_space<vmem>>, %arg4: memref<4x18x16xf32, #tpu.memory_space<vmem>>) attributes {dimension_semantics = [#tpu.dimension_semantics<parallel>], iteration_bounds = array<i64: 2>, scalar_prefetch = 0 : i64, scratch_operands = 2 : i64, tpu.core_type = #tpu.core_type<tc>, window_params = [{transform_indices = @transform_0, window_bounds = array<i64: 4, 16, 16>}, {transform_indices = @transform_1, window_bounds = array<i64: 4, 16, 16>}]} {
    %c0 = arith.constant 0 : index
    %c0_0 = arith.constant 0 : index
    %c0_1 = arith.constant 0 : index
    %0 = vector.load %arg1[%c0, %c0_0, %c0_1] : memref<4x16x16xf32, #tpu.memory_space<vmem>>, vector<4x16x16xf32>
    %c0_2 = arith.constant 0 : index
    %c0_3 = arith.constant 0 : index
    %c1 = arith.constant 1 : index
    %1 = vector.load %arg3[%c0_2, %c0_3, %c1] : memref<4x16x18xf32, #tpu.memory_space<vmem>>, vector<4x16x16xf32>
    tpu.vector_store %arg3[%c0_2, %c0_3, %c1], %0 {strides = array<i32>} : memref<4x16x18xf32, #tpu.memory_space<vmem>>, vector<4x16x16xf32>,
    %2 = vector.extract_strided_slice %0 {offsets = [0, 0, 1], sizes = [4, 16, 1], strides = [1, 1, 1]} : vector<4x16x16xf32> to vector<4x16x1xf32>
    %c0_4 = arith.constant 0 : index
    %c0_5 = arith.constant 0 : index
    %c0_6 = arith.constant 0 : index
    %3 = vector.load %arg3[%c0_4, %c0_5, %c0_6] : memref<4x16x18xf32, #tpu.memory_space<vmem>>, vector<4x16x1xf32>
    tpu.vector_store %arg3[%c0_4, %c0_5, %c0_6], %2 {strides = array<i32>} : memref<4x16x18xf32, #tpu.memory_space<vmem>>, vector<4x16x1xf32>,
    %4 = vector.extract_strided_slice %0 {offsets = [0, 0, 14], sizes = [4, 16, 1], strides = [1, 1, 1]} : vector<4x16x16xf32> to vector<4x16x1xf32>
    %c0_7 = arith.constant 0 : index
    %c0_8 = arith.constant 0 : index
    %c17 = arith.constant 17 : index
    %5 = vector.load %arg3[%c0_7, %c0_8, %c17] : memref<4x16x18xf32, #tpu.memory_space<vmem>>, vector<4x16x1xf32>
    tpu.vector_store %arg3[%c0_7, %c0_8, %c17], %4 {strides = array<i32>} : memref<4x16x18xf32, #tpu.memory_space<vmem>>, vector<4x16x1xf32>,
    %c0_9 = arith.constant 0 : index
    %c0_10 = arith.constant 0 : index
    %c0_11 = arith.constant 0 : index
    %6 = vector.load %arg3[%c0_9, %c0_10, %c0_11] : memref<4x16x18xf32, #tpu.memory_space<vmem>>, vector<4x16x16xf32>
    %c0_12 = arith.constant 0 : index
    %c0_13 = arith.constant 0 : index
    %c1_14 = arith.constant 1 : index
    %7 = vector.load %arg3[%c0_12, %c0_13, %c1_14] : memref<4x16x18xf32, #tpu.memory_space<vmem>>, vector<4x16x16xf32>
    %8 = arith.addf %6, %7 : vector<4x16x16xf32>
    %c0_15 = arith.constant 0 : index
    %c0_16 = arith.constant 0 : index
    %c2 = arith.constant 2 : index
    %9 = vector.load %arg3[%c0_15, %c0_16, %c2] : memref<4x16x18xf32, #tpu.memory_space<vmem>>, vector<4x16x16xf32>
    %10 = arith.addf %8, %9 : vector<4x16x16xf32>
    %c0_17 = arith.constant 0 : index
    %c1_18 = arith.constant 1 : index
    %c0_19 = arith.constant 0 : index
    %11 = vector.load %arg4[%c0_17, %c1_18, %c0_19] : memref<4x18x16xf32, #tpu.memory_space<vmem>>, vector<4x16x16xf32>
    tpu.vector_store %arg4[%c0_17, %c1_18, %c0_19], %10 {strides = array<i32>} : memref<4x18x16xf32, #tpu.memory_space<vmem>>, vector<4x16x16xf32>,
    %12 = vector.extract_strided_slice %10 {offsets = [0, 1, 0], sizes = [4, 1, 16], strides = [1, 1, 1]} : vector<4x16x16xf32> to vector<4x1x16xf32>
    %c0_20 = arith.constant 0 : index
    %c0_21 = arith.constant 0 : index
    %c0_22 = arith.constant 0 : index
    %13 = vector.load %arg4[%c0_20, %c0_21, %c0_22] : memref<4x18x16xf32, #tpu.memory_space<vmem>>, vector<4x1x16xf32>
    tpu.vector_store %arg4[%c0_20, %c0_21, %c0_22], %12 {strides = array<i32>} : memref<4x18x16xf32, #tpu.memory_space<vmem>>, vector<4x1x16xf32>,
    %14 = vector.extract_strided_slice %10 {offsets = [0, 14, 0], sizes = [4, 1, 16], strides = [1, 1, 1]} : vector<4x16x16xf32> to vector<4x1x16xf32>
    %c0_23 = arith.constant 0 : index
    %c17_24 = arith.constant 17 : index
    %c0_25 = arith.constant 0 : index
    %15 = vector.load %arg4[%c0_23, %c17_24, %c0_25] : memref<4x18x16xf32, #tpu.memory_space<vmem>>, vector<4x1x16xf32>
    tpu.vector_store %arg4[%c0_23, %c17_24, %c0_25], %14 {strides = array<i32>} : memref<4x18x16xf32, #tpu.memory_space<vmem>>, vector<4x1x16xf32>,
    %c0_26 = arith.constant 0 : index
    %c0_27 = arith.constant 0 : index
    %c0_28 = arith.constant 0 : index
    %16 = vector.load %arg4[%c0_26, %c0_27, %c0_28] : memref<4x18x16xf32, #tpu.memory_space<vmem>>, vector<4x16x16xf32>
    %c0_29 = arith.constant 0 : index
    %c1_30 = arith.constant 1 : index
    %c0_31 = arith.constant 0 : index
    %17 = vector.load %arg4[%c0_29, %c1_30, %c0_31] : memref<4x18x16xf32, #tpu.memory_space<vmem>>, vector<4x16x16xf32>
    %18 = arith.addf %16, %17 : vector<4x16x16xf32>
    %c0_32 = arith.constant 0 : index
    %c2_33 = arith.constant 2 : index
    %c0_34 = arith.constant 0 : index
    %19 = vector.load %arg4[%c0_32, %c2_33, %c0_34] : memref<4x18x16xf32, #tpu.memory_space<vmem>>, vector<4x16x16xf32>
    %20 = arith.addf %18, %19 : vector<4x16x16xf32>
    %cst = arith.constant 0.111111112 : f32
    %21 = vector.broadcast %cst : f32 to vector<4x16x16xf32>
    %22 = arith.mulf %20, %21 : vector<4x16x16xf32>
    %c0_35 = arith.constant 0 : index
    %c0_36 = arith.constant 0 : index
    %c0_37 = arith.constant 0 : index
    %23 = vector.load %arg2[%c0_35, %c0_36, %c0_37] : memref<4x16x16xf32, #tpu.memory_space<vmem>>, vector<4x16x16xf32>
    tpu.vector_store %arg2[%c0_35, %c0_36, %c0_37], %22 {strides = array<i32>} : memref<4x16x16xf32, #tpu.memory_space<vmem>>, vector<4x16x16xf32>,
    return
  }
  func.func @transform_0(%arg0: i32) -> (i32, i32, i32) {
    %c0_i32 = arith.constant 0 : i32
    %c0_i32_0 = arith.constant 0 : i32
    %c0_i32_1 = arith.constant 0 : i32
    return %arg0, %c0_i32, %c0_i32_0 : i32, i32, i32
  }
  func.func @transform_1(%arg0: i32) -> (i32, i32, i32) {
    %c0_i32 = arith.constant 0 : i32
    %c0_i32_0 = arith.constant 0 : i32
    %c0_i32_1 = arith.constant 0 : i32
    return %arg0, %c0_i32, %c0_i32_0 : i32, i32, i32
  }
}

</mosaic_0001>

<llo_original>
// kernel: tpu_custom_call.1
$region0: #{tpu_custom_call.1}
  #allocation0 [shape = 'u32[]', space=smem, size = 0x4, offset = 0x4, fixed_abs, tag = 'smem constant byte address 0x4 - core index']
  #allocation1 [shape = 'u32[144,128]{1,0:T(1,128)}', space=vmem, size = 0x12000, scoped, tag = 'internal scratch']
  #allocation2 [shape = 'f32[4,16,18]{2,1,0:T(8,128)}', space=vmem, size = 0x8000, scoped, tag = 'scratch operand']
  #allocation3 [shape = 'f32[4,18,16]{2,1,0:T(8,128)}', space=vmem, size = 0xc000, scoped, tag = 'scratch operand']
  %s0 = inlined_call_operand.hbm [shape: f32[8,16,16], index: 0, kind: input, shape index: {}]
  %s1 = inlined_call_operand.hbm [shape: f32[8,16,16], index: 1, kind: output, shape index: {}]
  %s2 = sld [smem:[#allocation0]]
  $region41: #{tpu_custom_call.1} parent=0
    _
  %s4 = ssub.s32 1, %s2
  %s5 = scalar_select 0, %s4, %s2
  $region1: #{tpu_custom_call.1} parent=0
    #allocation4 [shape = 'u8[65536]{0}', space=vmem, size = 0x10000, scoped, tag = 'input window, operand 0']
    #allocation5 [shape = 's32[2]{0}', space=sflag, size = 0x8, scoped, tag = 'scoped memory for tpu_custom_call.1']
    #allocation6 [shape = 's32[2]{0}', space=sflag, size = 0x8, scoped, tag = 'scoped memory for tpu_custom_call.1']
    #allocation7 [shape = 'u8[65536]{0}', space=vmem, size = 0x10000, scoped, tag = 'output window, operand 0']
    %6 = vsyncpa [#allocation5], 0
    %s7 = scalar_lea.sflag [#allocation5], 1
    %8 = vsyncpa %s7, 0
    %9 = vsyncpa [#allocation6], 0
    %s10 = scalar_lea.sflag [#allocation6], 1
    %11 = vsyncpa %s10, 0
    loop: start=0, step=1, limit=4
    $region2: #{tpu_custom_call.1} parent=1 // loop_pre_header
      _
    $region3: #{tpu_custom_call.1} parent=1 // loop_header
      %s13 = sphi 0, %s17
      %p14 = scmp.ge.s32.totalorder %s13, 4
      %s23 = sphi 0, %s25
      %s26 = sphi 0, %s23
      %s27 = sphi 0, %s26
      %s43 = sphi 0, %s27
      %s49 = sphi 0, %s51
      %s52 = sphi 0, %s49
      %s53 = sphi 0, %s52
      %s69 = sphi 0, %s53
    $region4: #{tpu_custom_call.1} parent=1 // loop_header_branch
      %16 = sbr.rel (%p14) target = $region8
    $region5: #{tpu_custom_call.1} parent=1 // loop_body
      %s18 = ssub.s32 %s13, 1
      %s19 = ssub.s32 %s13, 2
      %s20 = sadd.s32 %s13, 1
      %s21 = ssub.s32 %s13, %s20
      %p22 = scmp.eq.s32.totalorder %s21, 0
      %s24 = sadd.s32 %s23, 1
      %s25 = scalar_select %p22, %s23, %s24
      %p28 = pneg %p22
      %p29 = scmp.eq.s32.totalorder %s13, 1
      %p30 = por %p28, %p29
      %p31 = scmp.ne.s32.totalorder %s23, %s26
      %p32 = scmp.eq.s32.totalorder %s13, 0
      %p33 = por %p31, %p32
      %p34 = scmp.ne.s32.totalorder %s23, %s26
      %p35 = scmp.eq.s32.totalorder %s18, 1
      %p36 = por %p34, %p35
      %p37 = scmp.ne.s32.totalorder %s26, %s27
      %p38 = scmp.eq.s32.totalorder %s18, 0
      %p39 = por %p37, %p38
      %p40 = scmp.ne.s32.totalorder %s26, %s27
      %p41 = scmp.eq.s32.totalorder %s19, 1
      %p42 = por %p40, %p41
      %p44 = scmp.ne.s32.totalorder %s27, %s43
      %p45 = scmp.eq.s32.totalorder %s19, 0
      %p46 = por %p44, %p45
      %s47 = ssub.s32 %s13, %s20
      %p48 = scmp.eq.s32.totalorder %s47, 0
      %s50 = sadd.s32 %s49, 1
      %s51 = scalar_select %p48, %s49, %s50
      %p54 = pneg %p48
      %p55 = scmp.eq.s32.totalorder %s13, 1
      %p56 = por %p54, %p55
      %p57 = scmp.ne.s32.totalorder %s49, %s52
      %p58 = scmp.eq.s32.totalorder %s13, 0
      %p59 = por %p57, %p58
      %p60 = scmp.ne.s32.totalorder %s49, %s52
      %p61 = scmp.eq.s32.totalorder %s18, 1
      %p62 = por %p60, %p61
      %p63 = scmp.ne.s32.totalorder %s52, %s53
      %p64 = scmp.eq.s32.totalorder %s18, 0
      %p65 = por %p63, %p64
      %p66 = scmp.ne.s32.totalorder %s52, %s53
      %p67 = scmp.eq.s32.totalorder %s19, 1
      %p68 = por %p66, %p67
      %p70 = scmp.ne.s32.totalorder %s53, %s69
      %p71 = scmp.eq.s32.totalorder %s19, 0
      %p72 = por %p70, %p71
      %p73 = scmp.le.s32.totalorder 1, %s13
      %p74 = scmp.lt.s32.totalorder %s13, 3
      %p75 = pnand %p73, %p74
      %p76 = pneg %p75
      // Predicated region
      $region9: #{tpu_custom_call.1} parent=5 // pred_check
        _
      $region10: #{tpu_custom_call.1} parent=5 // pred_check_branch
        %78 = sbr.rel (%p75) target = $region12
      $region11: #{tpu_custom_call.1} parent=5 // pred_region
        %s79 = ssub.s32 %s13, 1
      $region12: #{tpu_custom_call.1} parent=5 // pred_fallthru
        _
      %p80 = scmp.lt.s32.totalorder %s13, 2
      // Predicated region
      $region13: #{tpu_custom_call.1} parent=5 // pred_check
        %p81 = pneg %p80
      $region14: #{tpu_custom_call.1} parent=5 // pred_check_branch
        %83 = sbr.rel (%p81) target = $region16
      $region15: #{tpu_custom_call.1} parent=5 // pred_region
        // Predicated region
        $region17: #{tpu_custom_call.1} parent=15 // pred_check
          %p84 = pneg %p33
        $region18: #{tpu_custom_call.1} parent=15 // pred_check_branch
          %86 = sbr.rel (%p84) target = $region20
        $region19: #{tpu_custom_call.1} parent=15 // pred_region
          %s87 = sand.u32 %s23, 1
          %s88 = scalar_lea.sflag [#allocation5], %s87
          %s89 = sand.u32 %s23, 1
          %s90 = smul.addr %s89, 64
          %s91 = scalar_lea.vmem [#allocation4], %s90
          %s92 = smul.u32 4, %s13
          %s94 = ssub.s32 1024, 1024
          %95 = vsyncadd %s88, %s94
          %s96 = smul.addr %s92, 2
          %s97 = smul.addr %s96, 128
          %s98 = scalar_lea.hbm %s0, %s97
          %s99 = sshll.u32 %s91, 4
          %s100 = int_to_ptr.vmem [resolvable:$true] %s99
          %105 = dma.hbm_to_vmem [thread:$0]  %s98, 1024, %s100, %s88, 128, 128, 8
        $region20: #{tpu_custom_call.1} parent=15 // pred_fallthru
          _
      $region16: #{tpu_custom_call.1} parent=5 // pred_fallthru
        _
      %p106 = scmp.le.s32.totalorder 1, %s13
      %p107 = scmp.lt.s32.totalorder %s13, 3
      %p108 = pnand %p106, %p107
      %p109 = pneg %p108
      // Predicated region
      $region21: #{tpu_custom_call.1} parent=5 // pred_check
        _
      $region22: #{tpu_custom_call.1} parent=5 // pred_check_branch
        %111 = sbr.rel (%p108) target = $region24
      $region23: #{tpu_custom_call.1} parent=5 // pred_region
        %s112 = ssub.s32 %s13, 1
        %s113 = sand.u32 %s26, 1
        %s114 = scalar_lea.sflag [#allocation5], %s113
        %s115 = sand.u32 %s26, 1
        %s116 = smul.addr %s115, 64
        %s117 = scalar_lea.vmem [#allocation4], %s116
        // Predicated region
        $region25: #{tpu_custom_call.1} parent=23 // pred_check
          %p118 = pneg %p39
        $region26: #{tpu_custom_call.1} parent=23 // pred_check_branch
          %120 = sbr.rel (%p118) target = $region28
        $region27: #{tpu_custom_call.1} parent=23 // pred_region
          %121 = dma.done %s114, 1024
        $region28: #{tpu_custom_call.1} parent=23 // pred_fallthru
          _
        %s122 = sand.u32 %s26, 1
        %s123 = scalar_lea.sflag [#allocation5], %s122
        %s124 = sand.u32 %s26, 1
        %s125 = smul.addr %s124, 64
        %s126 = scalar_lea.vmem [#allocation4], %s125
        %p127 = pneg %p39
        %p128 = pneg %p36
        %p129 = pneg %p65
        %p130 = pneg %p62
        %s131 = sand.u32 %s52, 1
        %s132 = scalar_lea.sflag [#allocation6], %s131
        %s133 = sand.u32 %s52, 1
        %s134 = smul.addr %s133, 64
        %s135 = scalar_lea.vmem [#allocation7], %s134
        %s136 = smul.u32 4, %s18
        %s137 = smul.u32 4, %s18
        %v138 = vld [vmem:[%s117] sm:$0xff]
        %v139 = vld [vmem:[%s117 + $0x8] sm:$0xff]
        %v140 = vld [vmem:[%s117 + $0x10] sm:$0xff]
        %v141 = vld [vmem:[%s117 + $0x18] sm:$0xff]
        %v142 = vld [vmem:[%s117 + $0x20] sm:$0xff]
        %v143 = vld [vmem:[%s117 + $0x28] sm:$0xff]
        %v144 = vld [vmem:[%s117 + $0x30] sm:$0xff]
        %v145 = vld [vmem:[%s117 + $0x38] sm:$0xff]
        %154 = vrot.lane.b32.xlu0 %v138, 1
        %v155 = vpop.permute.xlu0 %154
        %156 = vrot.lane.b32.xlu0 %v139, 1
        %v157 = vpop.permute.xlu0 %156
        %158 = vrot.lane.b32.xlu0 %v140, 1
        %v159 = vpop.permute.xlu0 %158
        %160 = vrot.lane.b32.xlu0 %v141, 1
        %v161 = vpop.permute.xlu0 %160
        %162 = vrot.lane.b32.xlu0 %v142, 1
        %v163 = vpop.permute.xlu0 %162
        %164 = vrot.lane.b32.xlu0 %v143, 1
        %v165 = vpop.permute.xlu0 %164
        %166 = vrot.lane.b32.xlu0 %v144, 1
        %v167 = vpop.permute.xlu0 %166
        %168 = vrot.lane.b32.xlu0 %v145, 1
        %v169 = vpop.permute.xlu0 %168
        %vm178 = vcmask 138248
        %179 = vst.msk [vmem:[#allocation2] sm:$0xff] %vm178, %v155
        %180 = vst.msk [vmem:[#allocation2 + $0x8] sm:$0xff] %vm178, %v157
        %181 = vst.msk [vmem:[#allocation2 + $0x10] sm:$0xff] %vm178, %v159
        %182 = vst.msk [vmem:[#allocation2 + $0x18] sm:$0xff] %vm178, %v161
        %183 = vst.msk [vmem:[#allocation2 + $0x20] sm:$0xff] %vm178, %v163
        %184 = vst.msk [vmem:[#allocation2 + $0x28] sm:$0xff] %vm178, %v165
        %185 = vst.msk [vmem:[#allocation2 + $0x30] sm:$0xff] %vm178, %v167
        %186 = vst.msk [vmem:[#allocation2 + $0x38] sm:$0xff] %vm178, %v169
        %187 = vrot.lane.b32.xlu0 %v138, 127
        %v188 = vpop.permute.xlu0 %187
        %189 = vrot.lane.b32.xlu0 %v139, 127
        %v190 = vpop.permute.xlu0 %189
        %191 = vrot.lane.b32.xlu0 %v140, 127
        %v192 = vpop.permute.xlu0 %191
        %193 = vrot.lane.b32.xlu0 %v141, 127
        %v194 = vpop.permute.xlu0 %193
        %195 = vrot.lane.b32.xlu0 %v142, 127
        %v196 = vpop.permute.xlu0 %195
        %197 = vrot.lane.b32.xlu0 %v143, 127
        %v198 = vpop.permute.xlu0 %197
        %199 = vrot.lane.b32.xlu0 %v144, 127
        %v200 = vpop.permute.xlu0 %199
        %201 = vrot.lane.b32.xlu0 %v145, 127
        %v202 = vpop.permute.xlu0 %201
        %vm211 = vcmask 7168
        %212 = vst.msk [vmem:[#allocation2] sm:$0xff] %vm211, %v188
        %213 = vst.msk [vmem:[#allocation2 + $0x8] sm:$0xff] %vm211, %v190
        %214 = vst.msk [vmem:[#allocation2 + $0x10] sm:$0xff] %vm211, %v192
        %215 = vst.msk [vmem:[#allocation2 + $0x18] sm:$0xff] %vm211, %v194
        %216 = vst.msk [vmem:[#allocation2 + $0x20] sm:$0xff] %vm211, %v196
        %217 = vst.msk [vmem:[#allocation2 + $0x28] sm:$0xff] %vm211, %v198
        %218 = vst.msk [vmem:[#allocation2 + $0x30] sm:$0xff] %vm211, %v200
        %219 = vst.msk [vmem:[#allocation2 + $0x38] sm:$0xff] %vm211, %v202
        %220 = vrot.lane.b32.xlu0 %v138, 3
        %v221 = vpop.permute.xlu0 %220
        %222 = vrot.lane.b32.xlu0 %v139, 3
        %v223 = vpop.permute.xlu0 %222
        %224 = vrot.lane.b32.xlu0 %v140, 3
        %v225 = vpop.permute.xlu0 %224
        %226 = vrot.lane.b32.xlu0 %v141, 3
        %v227 = vpop.permute.xlu0 %226
        %228 = vrot.lane.b32.xlu0 %v142, 3
        %v229 = vpop.permute.xlu0 %228
        %230 = vrot.lane.b32.xlu0 %v143, 3
        %v231 = vpop.permute.xlu0 %230
        %232 = vrot.lane.b32.xlu0 %v144, 3
        %v233 = vpop.permute.xlu0 %232
        %234 = vrot.lane.b32.xlu0 %v145, 3
        %v235 = vpop.permute.xlu0 %234
        %vm244 = vcmask 146568
        %245 = vst.msk [vmem:[#allocation2] sm:$0xff] %vm244, %v221
        %246 = vst.msk [vmem:[#allocation2 + $0x8] sm:$0xff] %vm244, %v223
        %247 = vst.msk [vmem:[#allocation2 + $0x10] sm:$0xff] %vm244, %v225
        %248 = vst.msk [vmem:[#allocation2 + $0x18] sm:$0xff] %vm244, %v227
        %249 = vst.msk [vmem:[#allocation2 + $0x20] sm:$0xff] %vm244, %v229
        %250 = vst.msk [vmem:[#allocation2 + $0x28] sm:$0xff] %vm244, %v231
        %251 = vst.msk [vmem:[#allocation2 + $0x30] sm:$0xff] %vm244, %v233
        %252 = vst.msk [vmem:[#allocation2 + $0x38] sm:$0xff] %vm244, %v235
        %v253 = vld [vmem:[#allocation2] sm:$0xff]
        %v254 = vld [vmem:[#allocation2 + $0x8] sm:$0xff]
        %v255 = vld [vmem:[#allocation2 + $0x10] sm:$0xff]
        %v256 = vld [vmem:[#allocation2 + $0x18] sm:$0xff]
        %v257 = vld [vmem:[#allocation2 + $0x20] sm:$0xff]
        %v258 = vld [vmem:[#allocation2 + $0x28] sm:$0xff]
        %v259 = vld [vmem:[#allocation2 + $0x30] sm:$0xff]
        %v260 = vld [vmem:[#allocation2 + $0x38] sm:$0xff]
        %269 = vrot.lane.b32.xlu0 %v253, 127
        %v270 = vpop.permute.xlu0 %269
        %271 = vrot.lane.b32.xlu0 %v254, 127
        %v272 = vpop.permute.xlu0 %271
        %273 = vrot.lane.b32.xlu0 %v255, 127
        %v274 = vpop.permute.xlu0 %273
        %275 = vrot.lane.b32.xlu0 %v256, 127
        %v276 = vpop.permute.xlu0 %275
        %277 = vrot.lane.b32.xlu0 %v257, 127
        %v278 = vpop.permute.xlu0 %277
        %279 = vrot.lane.b32.xlu0 %v258, 127
        %v280 = vpop.permute.xlu0 %279
        %281 = vrot.lane.b32.xlu0 %v259, 127
        %v282 = vpop.permute.xlu0 %281
        %283 = vrot.lane.b32.xlu0 %v260, 127
        %v284 = vpop.permute.xlu0 %283
        %v293 = vadd.f32 %v253, %v270
        %v294 = vadd.f32 %v254, %v272
        %v295 = vadd.f32 %v255, %v274
        %v296 = vadd.f32 %v256, %v276
        %v297 = vadd.f32 %v257, %v278
        %v298 = vadd.f32 %v258, %v280
        %v299 = vadd.f32 %v259, %v282
        %v300 = vadd.f32 %v260, %v284
        %301 = vrot.lane.b32.xlu0 %v253, 126
        %v302 = vpop.permute.xlu0 %301
        %303 = vrot.lane.b32.xlu0 %v254, 126
        %v304 = vpop.permute.xlu0 %303
        %305 = vrot.lane.b32.xlu0 %v255, 126
        %v306 = vpop.permute.xlu0 %305
        %307 = vrot.lane.b32.xlu0 %v256, 126
        %v308 = vpop.permute.xlu0 %307
        %309 = vrot.lane.b32.xlu0 %v257, 126
        %v310 = vpop.permute.xlu0 %309
        %311 = vrot.lane.b32.xlu0 %v258, 126
        %v312 = vpop.permute.xlu0 %311
        %313 = vrot.lane.b32.xlu0 %v259, 126
        %v314 = vpop.permute.xlu0 %313
        %315 = vrot.lane.b32.xlu0 %v260, 126
        %v316 = vpop.permute.xlu0 %315
        %v325 = vadd.f32 %v293, %v302
        %v326 = vadd.f32 %v294, %v304
        %v327 = vadd.f32 %v295, %v306
        %v328 = vadd.f32 %v296, %v308
        %v329 = vadd.f32 %v297, %v310
        %v330 = vadd.f32 %v298, %v312
        %v331 = vadd.f32 %v299, %v314
        %v332 = vadd.f32 %v300, %v316
        %vm333 = vcmask 130048
        %334 = vst.msk [vmem:[#allocation3 + $0x1] sm:$0xff] %vm333, %v325
        %335 = vst.msk [vmem:[#allocation3 + $0x9] sm:$0xff] %vm333, %v326
        %336 = vst.msk [vmem:[#allocation3 + $0x19] sm:$0xff] %vm333, %v327
        %337 = vst.msk [vmem:[#allocation3 + $0x21] sm:$0xff] %vm333, %v328
        %338 = vst.msk [vmem:[#allocation3 + $0x31] sm:$0xff] %vm333, %v329
        %339 = vst.msk [vmem:[#allocation3 + $0x39] sm:$0xff] %vm333, %v330
        %340 = vst.msk [vmem:[#allocation3 + $0x49] sm:$0xff] %vm333, %v331
        %341 = vst.msk [vmem:[#allocation3 + $0x51] sm:$0xff] %vm333, %v332
        %vm342 = vcmask 123905
        %343 = vst.msk [vmem:[#allocation3 - $0x1] sm:$0x2] %vm342, %v325
        %344 = vst.msk [vmem:[#allocation3 + $0x17] sm:$0x2] %vm342, %v327
        %345 = vst.msk [vmem:[#allocation3 + $0x2f] sm:$0x2] %vm342, %v329
        %346 = vst.msk [vmem:[#allocation3 + $0x47] sm:$0x2] %vm342, %v331
        %vm347 = vcmask 129030
        %348 = vst.msk [vmem:[#allocation3 + $0xb] sm:$0x40] %vm347, %v326
        %349 = vst.msk [vmem:[#allocation3 + $0x23] sm:$0x40] %vm347, %v328
        %350 = vst.msk [vmem:[#allocation3 + $0x3b] sm:$0x40] %vm347, %v330
        %351 = vst.msk [vmem:[#allocation3 + $0x53] sm:$0x40] %vm347, %v332
        %v352 = vld [vmem:[#allocation3] sm:$0xff]
        %v353 = vld [vmem:[#allocation3 + $0x8] sm:$0xff]
        %v354 = vld [vmem:[#allocation3 + $0x18] sm:$0xff]
        %v355 = vld [vmem:[#allocation3 + $0x20] sm:$0xff]
        %v356 = vld [vmem:[#allocation3 + $0x30] sm:$0xff]
        %v357 = vld [vmem:[#allocation3 + $0x38] sm:$0xff]
        %v358 = vld [vmem:[#allocation3 + $0x48] sm:$0xff]
        %v359 = vld [vmem:[#allocation3 + $0x50] sm:$0xff]
        %v360 = vld [vmem:[#allocation3 + $0x1] sm:$0xff]
        %v361 = vld [vmem:[#allocation3 + $0x9] sm:$0xff]
        %v362 = vld [vmem:[#allocation3 + $0x19] sm:$0xff]
        %v363 = vld [vmem:[#allocation3 + $0x21] sm:$0xff]
        %v364 = vld [vmem:[#allocation3 + $0x31] sm:$0xff]
        %v365 = vld [vmem:[#allocation3 + $0x39] sm:$0xff]
        %v366 = vld [vmem:[#allocation3 + $0x49] sm:$0xff]
        %v367 = vld [vmem:[#allocation3 + $0x51] sm:$0xff]
        %v368 = vadd.f32 %v352, %v360
        %v369 = vadd.f32 %v353, %v361
        %v370 = vadd.f32 %v354, %v362
        %v371 = vadd.f32 %v355, %v363
        %v372 = vadd.f32 %v356, %v364
        %v373 = vadd.f32 %v357, %v365
        %v374 = vadd.f32 %v358, %v366
        %v375 = vadd.f32 %v359, %v367
        %v376 = vld [vmem:[#allocation3 + $0x2] sm:$0xff]
        %v377 = vld [vmem:[#allocation3 + $0xa] sm:$0xff]
        %v378 = vld [vmem:[#allocation3 + $0x1a] sm:$0xff]
        %v379 = vld [vmem:[#allocation3 + $0x22] sm:$0xff]
        %v380 = vld [vmem:[#allocation3 + $0x32] sm:$0xff]
        %v381 = vld [vmem:[#allocation3 + $0x3a] sm:$0xff]
        %v382 = vld [vmem:[#allocation3 + $0x4a] sm:$0xff]
        %v383 = vld [vmem:[#allocation3 + $0x52] sm:$0xff]
        %v384 = vadd.f32 %v368, %v376
        %v385 = vadd.f32 %v369, %v377
        %v386 = vadd.f32 %v370, %v378
        %v387 = vadd.f32 %v371, %v379
        %v388 = vadd.f32 %v372, %v380
        %v389 = vadd.f32 %v373, %v381
        %v390 = vadd.f32 %v374, %v382
        %v391 = vadd.f32 %v375, %v383
        %v392 = vmul.f32 %v384, 0.11111111
        %v393 = vmul.f32 %v385, 0.11111111
        %v394 = vmul.f32 %v386, 0.11111111
        %v395 = vmul.f32 %v387, 0.11111111
        %v396 = vmul.f32 %v388, 0.11111111
        %v397 = vmul.f32 %v389, 0.11111111
        %v398 = vmul.f32 %v390, 0.11111111
        %v399 = vmul.f32 %v391, 0.11111111
        %400 = vst.msk [vmem:[%s135] sm:$0xff] %vm333, %v392
        %401 = vst.msk [vmem:[%s135 + $0x8] sm:$0xff] %vm333, %v393
        %402 = vst.msk [vmem:[%s135 + $0x10] sm:$0xff] %vm333, %v394
        %403 = vst.msk [vmem:[%s135 + $0x18] sm:$0xff] %vm333, %v395
        %404 = vst.msk [vmem:[%s135 + $0x20] sm:$0xff] %vm333, %v396
        %405 = vst.msk [vmem:[%s135 + $0x28] sm:$0xff] %vm333, %v397
        %406 = vst.msk [vmem:[%s135 + $0x30] sm:$0xff] %vm333, %v398
        %407 = vst.msk [vmem:[%s135 + $0x38] sm:$0xff] %vm333, %v399
        %s408 = sand.u32 %s52, 1
        %s409 = scalar_lea.sflag [#allocation6], %s408
        %s410 = sand.u32 %s52, 1
        %s411 = smul.addr %s410, 64
        %s412 = scalar_lea.vmem [#allocation7], %s411
        // Predicated region
        $region29: #{tpu_custom_call.1} parent=23 // pred_check
          %p413 = pneg %p62
        $region30: #{tpu_custom_call.1} parent=23 // pred_check_branch
          %415 = sbr.rel (%p413) target = $region32
        $region31: #{tpu_custom_call.1} parent=23 // pred_region
          %s416 = smul.u32 4, %s18
          %s418 = ssub.s32 1024, 1024
          %419 = vsyncadd %s409, %s418
          %s420 = smul.addr %s416, 2
          %s421 = smul.addr %s420, 128
          %s422 = scalar_lea.hbm %s1, %s421
          %s423 = sshll.u32 %s412, 4
          %s424 = int_to_ptr.vmem [resolvable:$true] %s423
          %429 = dma.vmem_to_hbm [thread:$0]  %s424, 1024, %s422, %s409, 128, 128, 8
        $region32: #{tpu_custom_call.1} parent=23 // pred_fallthru
          _
      $region24: #{tpu_custom_call.1} parent=5 // pred_fallthru
        _
      %p430 = scmp.le.s32.totalorder 2, %s13
      // Predicated region
      $region33: #{tpu_custom_call.1} parent=5 // pred_check
        %p431 = pneg %p430
      $region34: #{tpu_custom_call.1} parent=5 // pred_check_branch
        %433 = sbr.rel (%p431) target = $region36
      $region35: #{tpu_custom_call.1} parent=5 // pred_region
        %s434 = ssub.s32 %s13, 2
        // Predicated region
        $region37: #{tpu_custom_call.1} parent=35 // pred_check
          %p435 = pneg %p68
        $region38: #{tpu_custom_call.1} parent=35 // pred_check_branch
          %437 = sbr.rel (%p435) target = $region40
        $region39: #{tpu_custom_call.1} parent=35 // pred_region
          %s438 = sand.u32 %s53, 1
          %s439 = scalar_lea.sflag [#allocation6], %s438
          %s440 = sand.u32 %s53, 1
          %s441 = smul.addr %s440, 64
          %s442 = scalar_lea.vmem [#allocation7], %s441
          %443 = dma.done %s439, 1024
        $region40: #{tpu_custom_call.1} parent=35 // pred_fallthru
          _
      $region36: #{tpu_custom_call.1} parent=5 // pred_fallthru
        _
    $region6: #{tpu_custom_call.1} parent=1 // loop_footer
      %s17 = sadd.s32 1, %s13
    $region7: #{tpu_custom_call.1} parent=1 // loop_footer_branch
      %12 = sbr.rel target = $region3
    $region8: #{tpu_custom_call.1} parent=1 // loop_exit
      _
    %444 = vsyncpa [#allocation5], 1
    %s445 = scalar_lea.sflag [#allocation5], 1
    %446 = vsyncpa %s445, 1
    %447 = vsyncpa [#allocation6], 1
    %s448 = scalar_lea.sflag [#allocation6], 1
    %449 = vsyncpa %s448, 1

</llo_original>
